<compile_context>
chip_gen: v5e
topology: v5e:2x2
jax: 0.10.0
libtpu: 0.0.40
codegen_flags: <defaults>
</compile_context>

<pallas_src>
import functools

import jax
import jax.numpy as jnp
from jax import lax
from jax.experimental import pallas as pl
from jax.experimental.pallas import tpu as pltpu

LANES = 128
MAX_BLOCK_ROWS = 2048                 # 2048 x 128 x 4B = 1 MiB per f32 block
VMEM_LIMIT_BYTES = 32 * 1024 * 1024   # headroom on all generations


# ----------------------------- kernels ------------------------------------ #
def _mask_loss_all_kernel(x_ref, y_ref, m_ref, lsum_ref, msum_ref,
                          *, rows_total, block_rows, split_steps, ragged):
    """Per-split partial sums of (x-y)^2*mask and of mask."""
    j = pl.program_id(1)

    @pl.when(j == 0)
    def _():
        lsum_ref[...] = jnp.zeros_like(lsum_ref)
        msum_ref[...] = jnp.zeros_like(msum_ref)

    x = x_ref[...].astype(jnp.float32)
    y = y_ref[...].astype(jnp.float32)
    m = m_ref[...].astype(jnp.float32)
    d = x - y
    lm = d * d * m

    if ragged:
        # Last block overhangs the array: Pallas pads the load with garbage.
        # Zero both contributions for rows past the real row count.
        b = pl.program_id(0) * split_steps + j
        row = lax.broadcasted_iota(jnp.int32, (block_rows, LANES), 0)
        valid = (row + b * block_rows) < rows_total
        lm = jnp.where(valid, lm, 0.0)
        m = jnp.where(valid, m, 0.0)

    lsum_ref[...] += jnp.sum(lm, axis=0, keepdims=True)
    msum_ref[...] += jnp.sum(m, axis=0, keepdims=True)


def _mask_loss_none_kernel(x_ref, y_ref, m_ref, out_ref):
    """Elementwise (x - y)^2 * mask.  Ragged-block writes are clipped."""
    d = x_ref[...] - y_ref[...]
    out_ref[...] = (d * d * m_ref[...]).astype(out_ref.dtype)


# ----------------------------- wrapper ------------------------------------ #
def _as_rows(a):
    """View a as (rows, LANES). Pure reshape (free) when size % LANES == 0."""
    n = a.size
    flat = a.reshape(-1)
    rem = n % LANES
    if rem:
        # TODO(synk): only hit for sizes not divisible by 128; single small
        # pad copy (zeros in the mask keep both sums exact).
        flat = jnp.pad(flat, (0, LANES - rem))
    return flat.reshape(-1, LANES)


@functools.partial(jax.jit, static_argnames=("reduction", "max_block_rows"))
def mask_loss(x, y, mask, reduction="all", max_block_rows=MAX_BLOCK_ROWS):
    """JAX/Pallas equivalent of MaskLoss(reduction).forward with MSE loss."""
    orig_shape = x.shape
    n = x.size
    x2 = _as_rows(x)
    y2 = _as_rows(y)
    m2 = _as_rows(mask)
    rows = x2.shape[0]

    # Block rows: full array (any row count) or a multiple-of-8 tile.
    block_rows = rows if rows <= max_block_rows else max_block_rows
    if rows > max_block_rows:
        assert block_rows % 8 == 0, "max_block_rows must be a multiple of 8"
    num_blocks = pl.cdiv(rows, block_rows)
    ragged = (rows % block_rows) != 0
    in_block = (block_rows, LANES)

    if reduction == "all":
        # Two-level reduction: leading "parallel" axis lets v7x's 2 TCs each
        # take half the HBM stream; harmless on v5e/v6e.
        nsplit = 2 if (num_blocks >= 2 and num_blocks % 2 == 0) else 1
        j_steps = num_blocks // nsplit

        def in_map(s, j):
            return (s * j_steps + j, 0)

        def out_map(s, j):
            return (s, 0, 0)

        kernel = functools.partial(
            _mask_loss_all_kernel,
            rows_total=rows, block_rows=block_rows,
            split_steps=j_steps, ragged=ragged)

        lpart, mpart = pl.pallas_call(
            kernel,
            out_shape=(
                jax.ShapeDtypeStruct((nsplit, 1, LANES), jnp.float32),
                jax.ShapeDtypeStruct((nsplit, 1, LANES), jnp.float32),
            ),
            grid=(nsplit, j_steps),
            in_specs=[
                pl.BlockSpec(in_block, in_map),
                pl.BlockSpec(in_block, in_map),
                pl.BlockSpec(in_block, in_map),
            ],
            out_specs=(
                pl.BlockSpec((None, 1, LANES), out_map),
                pl.BlockSpec((None, 1, LANES), out_map),
            ),
            compiler_params=pltpu.CompilerParams(
                dimension_semantics=("parallel", "arbitrary"),
                vmem_limit_bytes=VMEM_LIMIT_BYTES,
            ),
        )(x2, y2, m2)
        # Tiny finalize in plain JAX.  (Note: all-zero mask -> divide by zero,
        # matching the PyTorch reference behavior.)
        return jnp.sum(lpart) / jnp.sum(mpart)

    elif reduction == "none":
        out_dtype = jnp.result_type(x.dtype, y.dtype, mask.dtype)
        out2 = pl.pallas_call(
            _mask_loss_none_kernel,
            out_shape=jax.ShapeDtypeStruct((rows, LANES), out_dtype),
            grid=(num_blocks,),
            in_specs=[
                pl.BlockSpec(in_block, lambda i: (i, 0)),
                pl.BlockSpec(in_block, lambda i: (i, 0)),
                pl.BlockSpec(in_block, lambda i: (i, 0)),
            ],
            out_specs=pl.BlockSpec(in_block, lambda i: (i, 0)),
            compiler_params=pltpu.CompilerParams(
                dimension_semantics=("parallel",),
                vmem_limit_bytes=VMEM_LIMIT_BYTES,
            ),
        )(x2, y2, m2)
        flat = out2.reshape(-1)
        if flat.shape[0] != n:          # only when a lane pad was needed
            flat = flat[:n]
        return flat.reshape(orig_shape)
    else:
        raise ValueError(f"unknown reduction: {reduction}")


# ----------------------------- reference ---------------------------------- #
def mask_loss_ref(x, y, mask, reduction="all"):
    l = (x - y) ** 2 * mask
    if reduction == "all":
        return jnp.sum(l) / jnp.sum(mask)
    return l


if __name__ == "__main__":
    root = jax.random.PRNGKey(0)

    # (shape, max_block_rows) chosen to exercise every code path at small
    # sizes: single-block, even multi-block (2-way parallel reduction),
    # ragged last block with odd and even block counts, and lane-pad path.
    cases = [
        ((2, 4, 16, 16), MAX_BLOCK_ROWS),   # single block
        ((4, 4, 64, 64), 64),               # 8 blocks, even -> 2-way split
        ((3, 4, 100, 128), 512),            # 3 blocks, ragged tail, nsplit=1
        ((3, 4, 100, 128), 640),            # 2 blocks, ragged tail, nsplit=2
        ((2, 3, 10, 10), MAX_BLOCK_ROWS),   # size % 128 != 0 -> lane pad
    ]

    for idx, (shape, mbr) in enumerate(cases):
        kx, ky, km = jax.random.split(jax.random.fold_in(root, idx), 3)
        x = jax.random.normal(kx, shape, dtype=jnp.float32)
        y = jax.random.normal(ky, shape, dtype=jnp.float32)
        mask = (jax.random.uniform(km, shape) > 0.5).astype(jnp.float32)

        # reduction='all' (scalar)
        out_all = mask_loss(x, y, mask, reduction="all", max_block_rows=mbr)
        jax.block_until_ready(out_all)
        ref_all = mask_loss_ref(x, y, mask, reduction="all")
        assert jnp.allclose(out_all, ref_all, rtol=1e-4, atol=1e-5), (
            shape, mbr, out_all, ref_all)

        # reduction='none' (elementwise)
        out_none = mask_loss(x, y, mask, reduction="none", max_block_rows=mbr)
        jax.block_until_ready(out_none)
        ref_none = mask_loss_ref(x, y, mask, reduction="none")
        assert out_none.shape == shape
        assert jnp.allclose(out_none, ref_none, rtol=1e-4, atol=1e-5), (shape, mbr)

    print("KERNEL_OK")
</pallas_src>

<mosaic_0001>
module attributes {stable_mosaic.version = 11 : i64} {
  func.func @_mask_loss_all_kernel(%arg0: i32, %arg1: i32, %arg2: memref<16x128xf32, #tpu.memory_space<vmem>>, %arg3: memref<16x128xf32, #tpu.memory_space<vmem>>, %arg4: memref<16x128xf32, #tpu.memory_space<vmem>>, %arg5: memref<1x1x128xf32, #tpu.memory_space<vmem>>, %arg6: memref<1x1x128xf32, #tpu.memory_space<vmem>>) attributes {dimension_semantics = [#tpu.dimension_semantics<parallel>, #tpu.dimension_semantics<arbitrary>], iteration_bounds = array<i64: 1, 1>, scalar_prefetch = 0 : i64, scratch_operands = 0 : i64, tpu.core_type = #tpu.core_type<tc>, window_params = [{transform_indices = @transform_0, window_bounds = array<i64: 16, 128>}, {transform_indices = @transform_1, window_bounds = array<i64: 16, 128>}, {transform_indices = @transform_2, window_bounds = array<i64: 16, 128>}, {transform_indices = @transform_3, window_bounds = array<i64: 1, 1, 128>}, {transform_indices = @transform_4, window_bounds = array<i64: 1, 1, 128>}]} {
    %c0_i32 = arith.constant 0 : i32
    %0 = arith.cmpi eq, %arg1, %c0_i32 : i32
    %1 = arith.extui %0 : i1 to i32
    %c0_i32_0 = arith.constant 0 : i32
    %2 = arith.cmpi ne, %1, %c0_i32_0 : i32
    scf.if %2 {
      %cst_19 = arith.constant 0.000000e+00 : f32
      %25 = vector.broadcast %cst_19 : f32 to vector<1x128xf32>
      %c0_20 = arith.constant 0 : index
      %c0_21 = arith.constant 0 : index
      %c0_22 = arith.constant 0 : index
      %26 = vector.load %arg5[%c0_20, %c0_21, %c0_22] : memref<1x1x128xf32, #tpu.memory_space<vmem>>, vector<1x1x128xf32>
      %27 = vector.shape_cast %26 : vector<1x1x128xf32> to vector<1x128xf32>
      %28 = vector.shape_cast %25 : vector<1x128xf32> to vector<1x1x128xf32>
      tpu.vector_store %arg5[%c0_20, %c0_21, %c0_22], %28 {strides = array<i32>} : memref<1x1x128xf32, #tpu.memory_space<vmem>>, vector<1x1x128xf32>,
      %cst_23 = arith.constant 0.000000e+00 : f32
      %29 = vector.broadcast %cst_23 : f32 to vector<1x128xf32>
      %c0_24 = arith.constant 0 : index
      %c0_25 = arith.constant 0 : index
      %c0_26 = arith.constant 0 : index
      %30 = vector.load %arg6[%c0_24, %c0_25, %c0_26] : memref<1x1x128xf32, #tpu.memory_space<vmem>>, vector<1x1x128xf32>
      %31 = vector.shape_cast %30 : vector<1x1x128xf32> to vector<1x128xf32>
      %32 = vector.shape_cast %29 : vector<1x128xf32> to vector<1x1x128xf32>
      tpu.vector_store %arg6[%c0_24, %c0_25, %c0_26], %32 {strides = array<i32>} : memref<1x1x128xf32, #tpu.memory_space<vmem>>, vector<1x1x128xf32>,
    } else {
    }
    %c0 = arith.constant 0 : index
    %c0_1 = arith.constant 0 : index
    %3 = vector.load %arg2[%c0, %c0_1] : memref<16x128xf32, #tpu.memory_space<vmem>>, vector<16x128xf32>
    %c0_2 = arith.constant 0 : index
    %c0_3 = arith.constant 0 : index
    %4 = vector.load %arg3[%c0_2, %c0_3] : memref<16x128xf32, #tpu.memory_space<vmem>>, vector<16x128xf32>
    %c0_4 = arith.constant 0 : index
    %c0_5 = arith.constant 0 : index
    %5 = vector.load %arg4[%c0_4, %c0_5] : memref<16x128xf32, #tpu.memory_space<vmem>>, vector<16x128xf32>
    %6 = arith.subf %3, %4 : vector<16x128xf32>
    %7 = arith.mulf %6, %6 : vector<16x128xf32>
    %8 = arith.mulf %7, %5 : vector<16x128xf32>
    %c0_6 = arith.constant 0 : index
    %c0_7 = arith.constant 0 : index
    %c0_8 = arith.constant 0 : index
    %9 = vector.load %arg5[%c0_6, %c0_7, %c0_8] : memref<1x1x128xf32, #tpu.memory_space<vmem>>, vector<1x1x128xf32>
    %10 = vector.shape_cast %9 : vector<1x1x128xf32> to vector<1x128xf32>
    %cst = arith.constant dense<0.000000e+00> : vector<128xf32>
    %11 = vector.multi_reduction <add>, %8, %cst [0] : vector<16x128xf32> to vector<128xf32>
    %12 = vector.shape_cast %11 : vector<128xf32> to vector<1x128xf32>
    %13 = arith.addf %10, %12 : vector<1x128xf32>
    %c0_9 = arith.constant 0 : index
    %c0_10 = arith.constant 0 : index
    %c0_11 = arith.constant 0 : index
    %14 = vector.load %arg5[%c0_9, %c0_10, %c0_11] : memref<1x1x128xf32, #tpu.memory_space<vmem>>, vector<1x1x128xf32>
    %15 = vector.shape_cast %14 : vector<1x1x128xf32> to vector<1x128xf32>
    %16 = vector.shape_cast %13 : vector<1x128xf32> to vector<1x1x128xf32>
    tpu.vector_store %arg5[%c0_9, %c0_10, %c0_11], %16 {strides = array<i32>} : memref<1x1x128xf32, #tpu.memory_space<vmem>>, vector<1x1x128xf32>,
    %c0_12 = arith.constant 0 : index
    %c0_13 = arith.constant 0 : index
    %c0_14 = arith.constant 0 : index
    %17 = vector.load %arg6[%c0_12, %c0_13, %c0_14] : memref<1x1x128xf32, #tpu.memory_space<vmem>>, vector<1x1x128xf32>
    %18 = vector.shape_cast %17 : vector<1x1x128xf32> to vector<1x128xf32>
    %cst_15 = arith.constant dense<0.000000e+00> : vector<128xf32>
    %19 = vector.multi_reduction <add>, %5, %cst_15 [0] : vector<16x128xf32> to vector<128xf32>
    %20 = vector.shape_cast %19 : vector<128xf32> to vector<1x128xf32>
    %21 = arith.addf %18, %20 : vector<1x128xf32>
    %c0_16 = arith.constant 0 : index
    %c0_17 = arith.constant 0 : index
    %c0_18 = arith.constant 0 : index
    %22 = vector.load %arg6[%c0_16, %c0_17, %c0_18] : memref<1x1x128xf32, #tpu.memory_space<vmem>>, vector<1x1x128xf32>
    %23 = vector.shape_cast %22 : vector<1x1x128xf32> to vector<1x128xf32>
    %24 = vector.shape_cast %21 : vector<1x128xf32> to vector<1x1x128xf32>
    tpu.vector_store %arg6[%c0_16, %c0_17, %c0_18], %24 {strides = array<i32>} : memref<1x1x128xf32, #tpu.memory_space<vmem>>, vector<1x1x128xf32>,
    return
  }
  func.func @transform_0(%arg0: i32, %arg1: i32) -> (i32, i32) {
    %c1_i32 = arith.constant 1 : i32
    %0 = arith.muli %arg0, %c1_i32 : i32
    %1 = arith.addi %0, %arg1 : i32
    %c0_i32 = arith.constant 0 : i32
    %c0_i32_0 = arith.constant 0 : i32
    return %1, %c0_i32 : i32, i32
  }
  func.func @transform_1(%arg0: i32, %arg1: i32) -> (i32, i32) {
    %c1_i32 = arith.constant 1 : i32
    %0 = arith.muli %arg0, %c1_i32 : i32
    %1 = arith.addi %0, %arg1 : i32
    %c0_i32 = arith.constant 0 : i32
    %c0_i32_0 = arith.constant 0 : i32
    return %1, %c0_i32 : i32, i32
  }
  func.func @transform_2(%arg0: i32, %arg1: i32) -> (i32, i32) {
    %c1_i32 = arith.constant 1 : i32
    %0 = arith.muli %arg0, %c1_i32 : i32
    %1 = arith.addi %0, %arg1 : i32
    %c0_i32 = arith.constant 0 : i32
    %c0_i32_0 = arith.constant 0 : i32
    return %1, %c0_i32 : i32, i32
  }
  func.func @transform_3(%arg0: i32, %arg1: i32) -> (i32, i32, i32) {
    %c0_i32 = arith.constant 0 : i32
    %c0_i32_0 = arith.constant 0 : i32
    %c0_i32_1 = arith.constant 0 : i32
    return %arg0, %c0_i32, %c0_i32_0 : i32, i32, i32
  }
  func.func @transform_4(%arg0: i32, %arg1: i32) -> (i32, i32, i32) {
    %c0_i32 = arith.constant 0 : i32
    %c0_i32_0 = arith.constant 0 : i32
    %c0_i32_1 = arith.constant 0 : i32
    return %arg0, %c0_i32, %c0_i32_0 : i32, i32, i32
  }
}

</mosaic_0001>

<llo_original>
// kernel: mask_loss.1
$region0: #{mask_loss.1}
  #allocation0 [shape = 'u32[]', space=smem, size = 0x4, offset = 0x4, fixed_abs, tag = 'smem constant byte address 0x4 - core index']
  #allocation1 [shape = 'u32[72,128]{1,0:T(1,128)}', space=vmem, size = 0x9000, scoped, tag = 'internal scratch']
  %s0 = inlined_call_operand.vmem [shape: f32[16,128], index: 0, kind: input, shape index: {}]
  %s1 = inlined_call_operand.vmem [shape: f32[16,128], index: 1, kind: input, shape index: {}]
  %s2 = inlined_call_operand.vmem [shape: f32[16,128], index: 2, kind: input, shape index: {}]
  %s3 = inlined_call_operand.vmem [shape: f32[1,1,128], index: 3, kind: output, shape index: {0}]
  %s4 = inlined_call_operand.vmem [shape: f32[1,1,128], index: 4, kind: output, shape index: {1}]
  %5 = xla_tuple %s3, %s4
  %s6 = sld [smem:[#allocation0]]
  $region34: #{mask_loss.1} parent=0
    _
  %s8 = ssub.s32 1, %s6
  %s9 = scalar_select 0, %s8, %s6
  // Predicated region
  $region2: #{mask_loss.1} parent=0 // pred_check
    _
  $region3: #{mask_loss.1} parent=0 // pred_check_branch
    %11 = sbr.rel (0) target = $region5
  $region4: #{mask_loss.1} parent=0 // pred_region
    %s12 = sadd.s32 0, 0
    %s13 = smul.u32 2, %s12
    %p14 = scmp.lt.s32.totalorder %s13, 1
    %s15 = scalar_select %p14, %s13, 1
    %s16 = smul.addr %s15, 8
    %s17 = scalar_lea.vmem %s0, %s16
    %s18 = sadd.s32 0, 0
    %s19 = smul.u32 2, %s18
  $region5: #{mask_loss.1} parent=0 // pred_fallthru
    _
  // Predicated region
  $region6: #{mask_loss.1} parent=0 // pred_check
    _
  $region7: #{mask_loss.1} parent=0 // pred_check_branch
    %21 = sbr.rel (0) target = $region9
  $region8: #{mask_loss.1} parent=0 // pred_region
    %s22 = sadd.s32 0, 0
    %s23 = smul.u32 2, %s22
    %p24 = scmp.lt.s32.totalorder %s23, 1
    %s25 = scalar_select %p24, %s23, 1
    %s26 = smul.addr %s25, 8
    %s27 = scalar_lea.vmem %s1, %s26
    %s28 = sadd.s32 0, 0
    %s29 = smul.u32 2, %s28
  $region9: #{mask_loss.1} parent=0 // pred_fallthru
    _
  // Predicated region
  $region10: #{mask_loss.1} parent=0 // pred_check
    _
  $region11: #{mask_loss.1} parent=0 // pred_check_branch
    %31 = sbr.rel (0) target = $region13
  $region12: #{mask_loss.1} parent=0 // pred_region
    %s32 = sadd.s32 0, 0
    %s33 = smul.u32 2, %s32
    %p34 = scmp.lt.s32.totalorder %s33, 1
    %s35 = scalar_select %p34, %s33, 1
    %s36 = smul.addr %s35, 8
    %s37 = scalar_lea.vmem %s2, %s36
    %s38 = sadd.s32 0, 0
    %s39 = smul.u32 2, %s38
  $region13: #{mask_loss.1} parent=0 // pred_fallthru
    _
  %s40 = sadd.s32 0, 0
  %s41 = smul.u32 2, %s40
  %p42 = scmp.lt.s32.totalorder %s41, 1
  %s43 = scalar_select %p42, %s41, 1
  %s44 = smul.addr %s43, 8
  %s45 = scalar_lea.vmem %s0, %s44
  %s46 = sadd.s32 0, 0
  %s47 = smul.u32 2, %s46
  %p48 = scmp.lt.s32.totalorder %s47, 1
  %s49 = scalar_select %p48, %s47, 1
  %s50 = smul.addr %s49, 8
  %s51 = scalar_lea.vmem %s1, %s50
  %s52 = sadd.s32 0, 0
  %s53 = smul.u32 2, %s52
  %p54 = scmp.lt.s32.totalorder %s53, 1
  %s55 = scalar_select %p54, %s53, 1
  %s56 = smul.addr %s55, 8
  %s57 = scalar_lea.vmem %s2, %s56
  %s58 = sadd.s32 0, 0
  %s59 = smul.u32 2, %s58
  %p60 = scmp.lt.s32.totalorder %s59, 1
  %s61 = scalar_select %p60, %s59, 1
  %s62 = smul.addr %s61, 8
  %s63 = scalar_lea.vmem %s0, %s62
  %s64 = sadd.s32 0, 0
  %s65 = smul.u32 2, %s64
  %s66 = sadd.s32 0, 0
  %s67 = smul.u32 2, %s66
  %p68 = scmp.lt.s32.totalorder %s67, 1
  %s69 = scalar_select %p68, %s67, 1
  %s70 = smul.addr %s69, 8
  %s71 = scalar_lea.vmem %s1, %s70
  %s72 = sadd.s32 0, 0
  %s73 = smul.u32 2, %s72
  %s74 = sadd.s32 0, 0
  %s75 = smul.u32 2, %s74
  %p76 = scmp.lt.s32.totalorder %s75, 1
  %s77 = scalar_select %p76, %s75, 1
  %s78 = smul.addr %s77, 8
  %s79 = scalar_lea.vmem %s2, %s78
  %s80 = sadd.s32 0, 0
  %s81 = smul.u32 2, %s80
  %p82 = scmp.eq.s32.totalorder 0, 0
  // Predicated region
  $region14: #{mask_loss.1} parent=0 // pred_check
    %p83 = pneg %p82
  $region15: #{mask_loss.1} parent=0 // pred_check_branch
    %85 = sbr.rel (%p83) target = $region17
  $region16: #{mask_loss.1} parent=0 // pred_region
    %86 = vst [vmem:[%s3] sm:$0x1] 0.0
    %87 = vst [vmem:[%s4] sm:$0x1] 0.0
  $region17: #{mask_loss.1} parent=0 // pred_fallthru
    _
  %v88 = vld [vmem:[%s63] sm:$0xff]
  %v89 = vld [vmem:[%s63 + $0x8] sm:$0xff]
  %v90 = vld [vmem:[%s71] sm:$0xff]
  %v91 = vld [vmem:[%s71 + $0x8] sm:$0xff]
  %v92 = vld [vmem:[%s79] sm:$0xff]
  %v93 = vld [vmem:[%s79 + $0x8] sm:$0xff]
  %v94 = vsub.f32 %v88, %v90
  %v95 = vsub.f32 %v89, %v91
  %v96 = vmul.f32 %v94, %v94
  %v97 = vmul.f32 %v95, %v95
  %v98 = vmul.f32 %v96, %v92
  %v99 = vmul.f32 %v97, %v93
  %v100 = vld [vmem:[%s3] sm:$0x1]
  %v101 = vadd.f32 %v98, %v99
  %v102 = vrot.slane %v101, 4
  %v103 = vadd.f32 %v101, %v102
  %v104 = vrot.slane %v103, 2
  %v105 = vadd.f32 %v103, %v104
  %v106 = vrot.slane %v105, 1
  %v107 = vadd.f32 %v105, %v106
  %v108 = vadd.f32 %v100, %v107
  %109 = vst [vmem:[%s3] sm:$0x1] %v108
  %v110 = vld [vmem:[%s4] sm:$0x1]
  %v111 = vadd.f32 %v92, %v93
  %v112 = vrot.slane %v111, 4
  %v113 = vadd.f32 %v111, %v112
  %v114 = vrot.slane %v113, 2
  %v115 = vadd.f32 %v113, %v114
  %v116 = vrot.slane %v115, 1
  %v117 = vadd.f32 %v115, %v116
  %v118 = vadd.f32 %v110, %v117
  %119 = vst [vmem:[%s4] sm:$0x1] %v118
  // Predicated region
  $region18: #{mask_loss.1} parent=0 // pred_check
    _
  $region19: #{mask_loss.1} parent=0 // pred_check_branch
    %121 = sbr.rel (0) target = $region21
  $region20: #{mask_loss.1} parent=0 // pred_region
    _
  $region21: #{mask_loss.1} parent=0 // pred_fallthru
    _
  // Predicated region
  $region22: #{mask_loss.1} parent=0 // pred_check
    _
  $region23: #{mask_loss.1} parent=0 // pred_check_branch
    %123 = sbr.rel (0) target = $region25
  $region24: #{mask_loss.1} parent=0 // pred_region
    _
  $region25: #{mask_loss.1} parent=0 // pred_fallthru
    _
  // Predicated region
  $region26: #{mask_loss.1} parent=0 // pred_check
    _
  $region27: #{mask_loss.1} parent=0 // pred_check_branch
    %125 = sbr.rel (0) target = $region29
  $region28: #{mask_loss.1} parent=0 // pred_region
    _
  $region29: #{mask_loss.1} parent=0 // pred_fallthru
    _
  // Predicated region
  $region30: #{mask_loss.1} parent=0 // pred_check
    _
  $region31: #{mask_loss.1} parent=0 // pred_check_branch
    %127 = sbr.rel (0) target = $region33
  $region32: #{mask_loss.1} parent=0 // pred_region
    _
  $region33: #{mask_loss.1} parent=0 // pred_fallthru
    _

</llo_original>
